<compile_context>
chip_gen: v5e
topology: v5e:2x2
jax: 0.10.0
libtpu: 0.0.40
codegen_flags: <defaults>
</compile_context>

<pallas_src>
import functools

import jax
import jax.numpy as jnp
from jax.experimental import pallas as pl
from jax.experimental.pallas import tpu as pltpu

LANE = 128
MAX_BLOCK_ROWS = 4096  # 4096*128*4B = 2 MiB/stream/step; 2 streams x 2 bufs
                       # = 8 MiB + 4 KiB scratch -> fits v5e/v6e/v7x scoped VMEM.


def _focal_loss_kernel(x_ref, t_ref, out_ref, acc_ref, *, gamma, gamma_int,
                       block_rows, rows, steps_total, needs_mask):
    step = pl.program_id(1)
    steps_per_shard = pl.num_programs(1)

    @pl.when(step == 0)
    def _init():
        acc_ref[...] = jnp.zeros_like(acc_ref)

    x = x_ref[...].astype(jnp.float32)
    t = t_ref[...].astype(jnp.float32)

    # Stable BCE-with-logits:
    #   x - x*t + max(-x,0) + log(exp(-max_val) + exp(-x - max_val))
    # == max(x,0) - x*t + log1p(exp(-|x|))
    e_x = jnp.exp(-jnp.abs(x))                                  # EUP
    bce = jnp.maximum(x, 0.0) - x * t + jnp.log1p(e_x)          # EUP (log1p)

    # Modulating factor: exp(gamma * logsigmoid(z)) == sigmoid(z)**gamma,
    # with z = -x * (2t - 1).
    z = x * (1.0 - 2.0 * t)
    if gamma_int is not None:
        if gamma_int == 0:
            loss = bce
        else:
            # Stable sigmoid: 1/(1+e) for z>=0, e/(1+e) for z<0, e = exp(-|z|).
            e_z = jnp.exp(-jnp.abs(z))                          # EUP
            d = 1.0 / (1.0 + e_z)
            sig = jnp.where(z >= 0.0, d, e_z * d)
            loss = jax.lax.integer_pow(sig, gamma_int) * bce    # VALU mults
    else:
        # General (non-integer) gamma fallback.
        invprobs = jnp.minimum(z, 0.0) - jnp.log1p(jnp.exp(-jnp.abs(z)))
        loss = jnp.exp(invprobs * gamma) * bce

    def _accumulate(v):
        # Vreg-wise partial sums into a single (8,128) accumulator; the
        # reshape splits the sublane-tiled axis in groups of 8 (no tile
        # crossing), so this is pure VPU adds.
        acc_ref[...] += v.reshape(block_rows // 8, 8, LANE).sum(axis=0)

    if needs_mask:
        # Only the last global block can extend past the valid rows; mask it
        # there (row-level compare -> no int32 flat-index overflow) and keep
        # every other step mask-free.
        global_block = pl.program_id(0) * steps_per_shard + step
        is_edge = global_block == steps_total - 1

        @pl.when(jnp.logical_not(is_edge))
        def _bulk():
            _accumulate(loss)

        @pl.when(is_edge)
        def _edge():
            row = jax.lax.broadcasted_iota(jnp.int32, (block_rows, LANE), 0)
            valid = global_block * block_rows + row < rows
            _accumulate(jnp.where(valid, loss, 0.0))
    else:
        _accumulate(loss)

    @pl.when(step == steps_per_shard - 1)
    def _finalize():
        # Per-shard partial sum; the mean (sum of shards / n) is done in the
        # wrapper.
        out_ref[...] = jnp.sum(acc_ref[...], keepdims=True)


def focal_loss(x, target, gamma):
    if x.shape != target.shape:
        raise ValueError(
            "Target size ({}) must be the same as input size ({})".format(
                target.shape, x.shape
            )
        )
    n = x.size
    rows = pl.cdiv(n, LANE)
    block_rows = min(MAX_BLOCK_ROWS, pl.cdiv(rows, 8) * 8)  # multiple of 8
    steps_total = pl.cdiv(rows, block_rows)
    # Dual-TensorCore (v7x) sharding along a leading "parallel" axis; only
    # when the steps split evenly so no shard ever sees a fully-OOB block.
    n_shards = 2 if (steps_total >= 2 and steps_total % 2 == 0) else 1
    steps_per_shard = steps_total // n_shards
    needs_mask = steps_total * block_rows != rows

    gamma = float(gamma)
    gamma_int = int(gamma) if (gamma.is_integer() and 0 <= gamma <= 8) else None

    xf = x.reshape(-1)
    tf = target.reshape(-1)
    lane_pad = rows * LANE - n
    if lane_pad:
        # Sentinel pad (x=200, t=1): exp(-200) underflows to 0 in f32, so the
        # padded elements contribute exactly 0 to the sum and need no in-kernel
        # lane mask.  NOTE: this still materializes a padded copy in HBM.
        # TODO(synk): fully copy-free ragged tail (1-D BlockSpec / manual DMA
        # of the aligned prefix + tiny tail op) for non-lane-aligned shapes.
        xf = jnp.pad(xf, (0, lane_pad), constant_values=200.0)
        tf = jnp.pad(tf, (0, lane_pad), constant_values=1.0)
    xf = xf.reshape(rows, LANE)
    tf = tf.reshape(rows, LANE)

    kernel = functools.partial(
        _focal_loss_kernel,
        gamma=gamma,
        gamma_int=gamma_int,
        block_rows=block_rows,
        rows=int(rows),
        steps_total=int(steps_total),
        needs_mask=needs_mask,
    )

    partials = pl.pallas_call(
        kernel,
        out_shape=jax.ShapeDtypeStruct((n_shards, 1), jnp.float32),
        grid_spec=pltpu.PrefetchScalarGridSpec(
            num_scalar_prefetch=0,
            grid=(n_shards, steps_per_shard),
            in_specs=[
                pl.BlockSpec((block_rows, LANE),
                             lambda s, i: (s * steps_per_shard + i, 0)),
                pl.BlockSpec((block_rows, LANE),
                             lambda s, i: (s * steps_per_shard + i, 0)),
            ],
            out_specs=pl.BlockSpec((1, 1), lambda s, i: (s, 0)),
            scratch_shapes=[pltpu.VMEM((8, LANE), jnp.float32)],
        ),
        compiler_params=pltpu.CompilerParams(
            dimension_semantics=("parallel", "arbitrary")
        ),
    )(xf, tf)
    return jnp.sum(partials) / n


def focal_loss_ref(x, target, gamma):
    x = x.astype(jnp.float32)
    t = target.astype(jnp.float32)
    max_val = jnp.maximum(-x, 0.0)
    loss = x - x * t + max_val + jnp.log(
        jnp.exp(-max_val) + jnp.exp(-x - max_val)
    )
    invprobs = jax.nn.log_sigmoid(-x * (t * 2.0 - 1.0))
    loss = jnp.exp(invprobs * gamma) * loss
    return jnp.mean(loss)


if __name__ == "__main__":
    key = jax.random.PRNGKey(0)
    k1, k2 = jax.random.split(key)

    # FocalLoss(gamma) has no learnable parameters; gamma is a constant.
    gamma = 2.0

    # Synthetic logits + binary targets, NCHW (2, 4, 16, 16).
    x = jax.random.normal(k1, (2, 4, 16, 16), dtype=jnp.float32)
    target = jax.random.bernoulli(k2, p=0.3, shape=(2, 4, 16, 16)).astype(
        jnp.float32
    )

    out = focal_loss(x, target, gamma)
    out = jax.block_until_ready(out)

    ref = focal_loss_ref(x, target, gamma)
    assert jnp.allclose(out, ref, rtol=1e-5, atol=1e-6), (out, ref)

    print("KERNEL_OK")
</pallas_src>

<mosaic_0001>
module attributes {stable_mosaic.version = 11 : i64} {
  func.func @_focal_loss_kernel(%arg0: i32, %arg1: i32, %arg2: memref<16x128xf32, #tpu.memory_space<vmem>>, %arg3: memref<16x128xf32, #tpu.memory_space<vmem>>, %arg4: memref<1x1xf32, #tpu.memory_space<vmem>>, %arg5: memref<8x128xf32, #tpu.memory_space<vmem>>) attributes {dimension_semantics = [#tpu.dimension_semantics<parallel>, #tpu.dimension_semantics<arbitrary>], iteration_bounds = array<i64: 1, 1>, scalar_prefetch = 0 : i64, scratch_operands = 1 : i64, tpu.core_type = #tpu.core_type<tc>, window_params = [{transform_indices = @transform_0, window_bounds = array<i64: 16, 128>}, {transform_indices = @transform_1, window_bounds = array<i64: 16, 128>}, {transform_indices = @transform_2, window_bounds = array<i64: 1, 1>}]} {
    %c0_i32 = arith.constant 0 : i32
    %0 = arith.cmpi eq, %arg1, %c0_i32 : i32
    %1 = arith.extui %0 : i1 to i32
    %c0_i32_0 = arith.constant 0 : i32
    %2 = arith.cmpi ne, %1, %c0_i32_0 : i32
    scf.if %2 {
      %cst_18 = arith.constant 0.000000e+00 : f32
      %42 = vector.broadcast %cst_18 : f32 to vector<8x128xf32>
      %c0_19 = arith.constant 0 : index
      %c0_20 = arith.constant 0 : index
      %43 = vector.load %arg5[%c0_19, %c0_20] : memref<8x128xf32, #tpu.memory_space<vmem>>, vector<8x128xf32>
      tpu.vector_store %arg5[%c0_19, %c0_20], %42 {strides = array<i32>} : memref<8x128xf32, #tpu.memory_space<vmem>>, vector<8x128xf32>,
    } else {
    }
    %c0 = arith.constant 0 : index
    %c0_1 = arith.constant 0 : index
    %3 = vector.load %arg2[%c0, %c0_1] : memref<16x128xf32, #tpu.memory_space<vmem>>, vector<16x128xf32>
    %c0_2 = arith.constant 0 : index
    %c0_3 = arith.constant 0 : index
    %4 = vector.load %arg3[%c0_2, %c0_3] : memref<16x128xf32, #tpu.memory_space<vmem>>, vector<16x128xf32>
    %5 = math.absf %3 : vector<16x128xf32>
    %cst = arith.constant 0.000000e+00 : f32
    %6 = vector.broadcast %cst : f32 to vector<16x128xf32>
    %7 = arith.subf %6, %5 : vector<16x128xf32>
    %8 = math.exp %7 : vector<16x128xf32>
    %cst_4 = arith.constant 0.000000e+00 : f32
    %9 = vector.broadcast %cst_4 : f32 to vector<16x128xf32>
    %10 = arith.maximumf %3, %9 : vector<16x128xf32>
    %11 = arith.mulf %3, %4 : vector<16x128xf32>
    %12 = arith.subf %10, %11 : vector<16x128xf32>
    %13 = math.log1p %8 : vector<16x128xf32>
    %14 = arith.addf %12, %13 : vector<16x128xf32>
    %cst_5 = arith.constant 2.000000e+00 : f32
    %15 = vector.broadcast %cst_5 : f32 to vector<16x128xf32>
    %16 = arith.mulf %15, %4 : vector<16x128xf32>
    %cst_6 = arith.constant 1.000000e+00 : f32
    %17 = vector.broadcast %cst_6 : f32 to vector<16x128xf32>
    %18 = arith.subf %17, %16 : vector<16x128xf32>
    %19 = arith.mulf %3, %18 : vector<16x128xf32>
    %20 = math.absf %19 : vector<16x128xf32>
    %cst_7 = arith.constant 0.000000e+00 : f32
    %21 = vector.broadcast %cst_7 : f32 to vector<16x128xf32>
    %22 = arith.subf %21, %20 : vector<16x128xf32>
    %23 = math.exp %22 : vector<16x128xf32>
    %cst_8 = arith.constant 1.000000e+00 : f32
    %24 = vector.broadcast %cst_8 : f32 to vector<16x128xf32>
    %25 = arith.addf %24, %23 : vector<16x128xf32>
    %cst_9 = arith.constant 1.000000e+00 : f32
    %26 = vector.broadcast %cst_9 : f32 to vector<16x128xf32>
    %27 = arith.divf %26, %25 : vector<16x128xf32>
    %cst_10 = arith.constant 0.000000e+00 : f32
    %28 = vector.broadcast %cst_10 : f32 to vector<16x128xf32>
    %29 = arith.cmpf oge, %19, %28 : vector<16x128xf32>
    %30 = arith.mulf %23, %27 : vector<16x128xf32>
    %31 = arith.select %29, %27, %30 : vector<16x128xi1>, vector<16x128xf32>
    %32 = arith.mulf %31, %31 : vector<16x128xf32>
    %33 = arith.mulf %32, %14 : vector<16x128xf32>
    %c0_11 = arith.constant 0 : index
    %c0_12 = arith.constant 0 : index
    %34 = vector.load %arg5[%c0_11, %c0_12] : memref<8x128xf32, #tpu.memory_space<vmem>>, vector<8x128xf32>
    %35 = vector.shape_cast %33 : vector<16x128xf32> to vector<2x8x128xf32>
    %cst_13 = arith.constant dense<0.000000e+00> : vector<8x128xf32>
    %36 = vector.multi_reduction <add>, %35, %cst_13 [0] : vector<2x8x128xf32> to vector<8x128xf32>
    %37 = arith.addf %34, %36 : vector<8x128xf32>
    %c0_14 = arith.constant 0 : index
    %c0_15 = arith.constant 0 : index
    %38 = vector.load %arg5[%c0_14, %c0_15] : memref<8x128xf32, #tpu.memory_space<vmem>>, vector<8x128xf32>
    tpu.vector_store %arg5[%c0_14, %c0_15], %37 {strides = array<i32>} : memref<8x128xf32, #tpu.memory_space<vmem>>, vector<8x128xf32>,
    %c0_i32_16 = arith.constant 0 : i32
    %39 = arith.cmpi eq, %arg1, %c0_i32_16 : i32
    %40 = arith.extui %39 : i1 to i32
    %c0_i32_17 = arith.constant 0 : i32
    %41 = arith.cmpi ne, %40, %c0_i32_17 : i32
    scf.if %41 {
      %c0_18 = arith.constant 0 : index
      %c0_19 = arith.constant 0 : index
      %42 = vector.load %arg5[%c0_18, %c0_19] : memref<8x128xf32, #tpu.memory_space<vmem>>, vector<8x128xf32>
      %43 = vector.shape_cast %42 : vector<8x128xf32> to vector<1x8x128xf32>
      %cst_20 = arith.constant dense<0.000000e+00> : vector<1xf32>
      %44 = vector.multi_reduction <add>, %43, %cst_20 [1, 2] : vector<1x8x128xf32> to vector<1xf32>
      %45 = vector.shape_cast %44 : vector<1xf32> to vector<1x1x1xf32>
      %46 = vector.extract %45[0, 0, 0] : f32 from vector<1x1x1xf32>
      %47 = vector.broadcast %46 : f32 to vector<1x1xf32>
      %c0_21 = arith.constant 0 : index
      %c0_22 = arith.constant 0 : index
      %48 = vector.load %arg4[%c0_21, %c0_22] : memref<1x1xf32, #tpu.memory_space<vmem>>, vector<1x1xf32>
      tpu.vector_store %arg4[%c0_21, %c0_22], %47 {strides = array<i32>} : memref<1x1xf32, #tpu.memory_space<vmem>>, vector<1x1xf32>,
    } else {
    }
    return
  }
  func.func @transform_0(%arg0: i32, %arg1: i32) -> (i32, i32) {
    %c1_i32 = arith.constant 1 : i32
    %0 = arith.muli %arg0, %c1_i32 : i32
    %1 = arith.addi %0, %arg1 : i32
    %c0_i32 = arith.constant 0 : i32
    %c0_i32_0 = arith.constant 0 : i32
    return %1, %c0_i32 : i32, i32
  }
  func.func @transform_1(%arg0: i32, %arg1: i32) -> (i32, i32) {
    %c1_i32 = arith.constant 1 : i32
    %0 = arith.muli %arg0, %c1_i32 : i32
    %1 = arith.addi %0, %arg1 : i32
    %c0_i32 = arith.constant 0 : i32
    %c0_i32_0 = arith.constant 0 : i32
    return %1, %c0_i32 : i32, i32
  }
  func.func @transform_2(%arg0: i32, %arg1: i32) -> (i32, i32) {
    %c0_i32 = arith.constant 0 : i32
    %c0_i32_0 = arith.constant 0 : i32
    return %arg0, %c0_i32 : i32, i32
  }
}

</mosaic_0001>

<llo_original>
// kernel: tpu_custom_call.1
$region0: #{tpu_custom_call.1}
  #allocation0 [shape = 'u32[]', space=smem, size = 0x4, offset = 0x4, fixed_abs, tag = 'smem constant byte address 0x4 - core index']
  #allocation1 [shape = 'u32[72,128]{1,0:T(1,128)}', space=vmem, size = 0x9000, scoped, tag = 'internal scratch']
  #allocation2 [shape = 'f32[8,128]{1,0:T(8,128)}', space=vmem, size = 0x1000, scoped, tag = 'scratch operand']
  %s0 = inlined_call_operand.hbm [shape: f32[16,128], index: 0, kind: input, shape index: {}]
  %s1 = inlined_call_operand.hbm [shape: f32[16,128], index: 1, kind: input, shape index: {}]
  %s2 = inlined_call_operand.hbm [shape: f32[1,1], index: 2, kind: output, shape index: {}]
  %s3 = sld [smem:[#allocation0]]
  $region34: #{tpu_custom_call.1} parent=0
    _
  %s5 = ssub.s32 1, %s3
  %s6 = scalar_select 0, %s5, %s3
  $region1: #{tpu_custom_call.1} parent=0
    #allocation3 [shape = 'u8[8192]{0}', space=vmem, size = 0x2000, scoped, tag = 'input window, operand 0, single buffered']
    #allocation4 [shape = 's32[1]{0}', space=sflag, size = 0x4, scoped, tag = 'scoped memory for tpu_custom_call.1']
    #allocation5 [shape = 's32[1]{0}', space=sflag, size = 0x4, scoped, tag = 'scoped memory for tpu_custom_call.1']
    #allocation6 [shape = 'u8[8192]{0}', space=vmem, size = 0x2000, scoped, tag = 'input window, operand 1, single buffered']
    #allocation7 [shape = 's32[1]{0}', space=sflag, size = 0x4, scoped, tag = 'scoped memory for tpu_custom_call.1']
    #allocation8 [shape = 'u8[512]{0}', space=vmem, size = 0x400, scoped, tag = 'output window, operand 0, single buffered']
    %7 = vsyncpa [#allocation4], 0
    %8 = vsyncpa [#allocation7], 0
    %9 = vsyncpa [#allocation5], 0
    // Predicated region
    $region2: #{tpu_custom_call.1} parent=1 // pred_check
      _
    $region3: #{tpu_custom_call.1} parent=1 // pred_check_branch
      %11 = sbr.rel (0) target = $region5
    $region4: #{tpu_custom_call.1} parent=1 // pred_region
      %s12 = sadd.s32 0, 0
      %s13 = smul.u32 2, %s12
      %15 = vsyncadd [#allocation4], 0
      %s16 = smul.addr %s13, 8
      %s17 = scalar_lea.hbm %s0, %s16
      %s18 = sshll.u32 %s17, 4
      %s19 = int_to_ptr.hbm [resolvable:$true] %s18
      %s20 = sshll.u32 [#allocation3], 4
      %s21 = int_to_ptr.vmem [resolvable:$true] %s20
      %26 = dma.hbm_to_vmem [thread:$0]  %s19, 256, %s21, [#allocation4], 128, 128, 8
    $region5: #{tpu_custom_call.1} parent=1 // pred_fallthru
      _
    // Predicated region
    $region6: #{tpu_custom_call.1} parent=1 // pred_check
      _
    $region7: #{tpu_custom_call.1} parent=1 // pred_check_branch
      %28 = sbr.rel (0) target = $region9
    $region8: #{tpu_custom_call.1} parent=1 // pred_region
      %s29 = sadd.s32 0, 0
      %s30 = smul.u32 2, %s29
      %32 = vsyncadd [#allocation7], 0
      %s33 = smul.addr %s30, 8
      %s34 = scalar_lea.hbm %s1, %s33
      %s35 = sshll.u32 %s34, 4
      %s36 = int_to_ptr.hbm [resolvable:$true] %s35
      %s37 = sshll.u32 [#allocation6], 4
      %s38 = int_to_ptr.vmem [resolvable:$true] %s37
      %43 = dma.hbm_to_vmem [thread:$0]  %s36, 256, %s38, [#allocation7], 128, 128, 8
    $region9: #{tpu_custom_call.1} parent=1 // pred_fallthru
      _
    // Predicated region
    $region10: #{tpu_custom_call.1} parent=1 // pred_check
      _
    $region11: #{tpu_custom_call.1} parent=1 // pred_check_branch
      %45 = sbr.rel (0) target = $region13
    $region12: #{tpu_custom_call.1} parent=1 // pred_region
      %47 = dma.done [#allocation4], 256
    $region13: #{tpu_custom_call.1} parent=1 // pred_fallthru
      _
    // Predicated region
    $region14: #{tpu_custom_call.1} parent=1 // pred_check
      _
    $region15: #{tpu_custom_call.1} parent=1 // pred_check_branch
      %49 = sbr.rel (0) target = $region17
    $region16: #{tpu_custom_call.1} parent=1 // pred_region
      %51 = dma.done [#allocation7], 256
    $region17: #{tpu_custom_call.1} parent=1 // pred_fallthru
      _
    %s52 = sadd.s32 0, 0
    %s53 = smul.u32 2, %s52
    %s54 = sadd.s32 0, 0
    %s55 = smul.u32 2, %s54
    %p56 = scmp.eq.s32.totalorder 0, 0
    // Predicated region
    $region18: #{tpu_custom_call.1} parent=1 // pred_check
      %p57 = pneg %p56
    $region19: #{tpu_custom_call.1} parent=1 // pred_check_branch
      %59 = sbr.rel (%p57) target = $region21
    $region20: #{tpu_custom_call.1} parent=1 // pred_region
      %60 = vst [vmem:[#allocation2] sm:$0xff] 0.0
    $region21: #{tpu_custom_call.1} parent=1 // pred_fallthru
      _
    %v61 = vld [vmem:[#allocation3] sm:$0xff]
    %v62 = vld [vmem:[#allocation3 + $0x8] sm:$0xff]
    %v63 = vld [vmem:[#allocation6] sm:$0xff]
    %v64 = vld [vmem:[#allocation6 + $0x8] sm:$0xff]
    %v65 = vand.u32 2147483647, %v61
    %v66 = vand.u32 2147483647, %v62
    %v67 = vsub.f32 0.0, %v65
    %v68 = vsub.f32 0.0, %v66
    %v69 = vmul.f32 %v67, 1.442695
    %v70 = vpow.pop %v69
    %v71 = vmul.f32 %v68, 1.442695
    %v72 = vpow.pop %v71
    %v73 = vmax.f32 %v61, 0.0
    %v74 = vmax.f32 %v62, 0.0
    %v75 = vmul.f32 %v61, %v63
    %v76 = vmul.f32 %v62, %v64
    %v77 = vsub.f32 %v73, %v75
    %v78 = vsub.f32 %v74, %v76
    %v79 = vadd.f32 %v70, 1.0
    %v80 = vlog2.pop %v79
    %v81 = vmul.f32 %v80, 0.6931472
    %v82 = vmul.f32 -0.5, %v70
    %v83 = vadd.f32 %v82, 1.0
    %v84 = vmul.f32 %v83, %v70
    %v85 = vand.u32 2147483647, %v70
    %vm86 = vcmp.lt.f32.partialorder %v85, 0.0004427343
    %v87 = vsel %vm86, %v84, %v81
    %v88 = vadd.f32 %v72, 1.0
    %v89 = vlog2.pop %v88
    %v90 = vmul.f32 %v89, 0.6931472
    %v91 = vmul.f32 -0.5, %v72
    %v92 = vadd.f32 %v91, 1.0
    %v93 = vmul.f32 %v92, %v72
    %v94 = vand.u32 2147483647, %v72
    %vm95 = vcmp.lt.f32.partialorder %v94, 0.0004427343
    %v96 = vsel %vm95, %v93, %v90
    %v97 = vadd.f32 %v77, %v87
    %v98 = vadd.f32 %v78, %v96
    %v99 = vmul.f32 %v63, 2.0
    %v100 = vmul.f32 %v64, 2.0
    %v101 = vsub.f32 1.0, %v99
    %v102 = vsub.f32 1.0, %v100
    %v103 = vmul.f32 %v61, %v101
    %v104 = vmul.f32 %v62, %v102
    %v105 = vand.u32 2147483647, %v103
    %v106 = vand.u32 2147483647, %v104
    %v107 = vsub.f32 0.0, %v105
    %v108 = vsub.f32 0.0, %v106
    %v109 = vmul.f32 %v107, 1.442695
    %v110 = vpow.pop %v109
    %v111 = vmul.f32 %v108, 1.442695
    %v112 = vpow.pop %v111
    %v113 = vadd.f32 %v110, 1.0
    %v114 = vadd.f32 %v112, 1.0
    %v115 = vrcp.pop %v113
    %v116 = vmul.f32 %v113, %v115
    %v117 = vsub.f32 1.0, %v116
    %v118 = vmul.f32 %v115, %v117
    %v119 = vadd.f32 %v115, %v118
    %vm120 = vweird.f32 %v113
    %vm121 = vweird.f32 %v115
    %vm122 = vmor %vm120, %vm121
    %v123 = vsel %vm122, %v115, %v119
    %v124 = vand.u32 2147483647, %v113
    %vm125 = vcmp.eq.f32.partialorder %v124, 8.507059e+37
    %v126 = vand.u32 %v113, 2147483648
    %v127 = vor.u32 1.1754944e-38, %v126
    %v128 = vsel %vm125, %v127, %v123
    %v129 = vmul.f32 1.0, %v128
    %v130 = vrcp.pop %v114
    %v131 = vmul.f32 %v114, %v130
    %v132 = vsub.f32 1.0, %v131
    %v133 = vmul.f32 %v130, %v132
    %v134 = vadd.f32 %v130, %v133
    %vm135 = vweird.f32 %v114
    %vm136 = vweird.f32 %v130
    %vm137 = vmor %vm135, %vm136
    %v138 = vsel %vm137, %v130, %v134
    %v139 = vand.u32 2147483647, %v114
    %vm140 = vcmp.eq.f32.partialorder %v139, 8.507059e+37
    %v141 = vand.u32 %v114, 2147483648
    %v142 = vor.u32 1.1754944e-38, %v141
    %v143 = vsel %vm140, %v142, %v138
    %v144 = vmul.f32 1.0, %v143
    %vm145 = vcmp.ge.f32.partialorder %v103, 0.0
    %vm146 = vcmp.ge.f32.partialorder %v104, 0.0
    %v147 = vmul.f32 %v110, %v129
    %v148 = vmul.f32 %v112, %v144
    %v149 = vsel %vm145, %v129, %v147
    %v150 = vsel %vm146, %v144, %v148
    %v151 = vmul.f32 %v149, %v149
    %v152 = vmul.f32 %v150, %v150
    %v153 = vmul.f32 %v151, %v97
    %v154 = vmul.f32 %v152, %v98
    %v155 = vld [vmem:[#allocation2] sm:$0xff]
    %v156 = vadd.f32 %v153, %v154
    %v157 = vadd.f32 %v155, %v156
    %158 = vst [vmem:[#allocation2] sm:$0xff] %v157
    // Predicated region
    $region22: #{tpu_custom_call.1} parent=1 // pred_check
      %p159 = pneg %p56
    $region23: #{tpu_custom_call.1} parent=1 // pred_check_branch
      %161 = sbr.rel (%p159) target = $region25
    $region24: #{tpu_custom_call.1} parent=1 // pred_region
      %v162 = vld [vmem:[#allocation2] sm:$0xff]
      %163 = vadd.xlane.f32.xlu0 %v162
      %v164 = vpop.xlane.xlu0 %163
      %v165 = vrot.slane %v164, 4
      %v166 = vadd.f32 %v164, %v165
      %v167 = vrot.slane %v166, 2
      %v168 = vadd.f32 %v166, %v167
      %v169 = vrot.slane %v168, 1
      %v170 = vadd.f32 %v168, %v169
      %s171 = vtos %v170
      %v172 = vstv %s171
      %vm173 = vcmask 0
      %174 = vst.msk [vmem:[#allocation8] sm:$0x1] %vm173, %v172
    $region25: #{tpu_custom_call.1} parent=1 // pred_fallthru
      _
    // Predicated region
    $region26: #{tpu_custom_call.1} parent=1 // pred_check
      _
    $region27: #{tpu_custom_call.1} parent=1 // pred_check_branch
      %176 = sbr.rel (0) target = $region29
    $region28: #{tpu_custom_call.1} parent=1 // pred_region
      %178 = vsyncadd [#allocation5], 0
      %s180 = sshll.u32 [#allocation8], 4
      %s181 = int_to_ptr.vmem [resolvable:$true] %s180
      %s182 = sshll.u32 %s2, 4
      %s183 = int_to_ptr.hbm [resolvable:$true] %s182
      %185 = dma.vmem_to_hbm [thread:$0]  %s181, 16, %s183, [#allocation5]
    $region29: #{tpu_custom_call.1} parent=1 // pred_fallthru
      _
    // Predicated region
    $region30: #{tpu_custom_call.1} parent=1 // pred_check
      _
    $region31: #{tpu_custom_call.1} parent=1 // pred_check_branch
      %187 = sbr.rel (0) target = $region33
    $region32: #{tpu_custom_call.1} parent=1 // pred_region
      %189 = dma.done [#allocation5], 16
    $region33: #{tpu_custom_call.1} parent=1 // pred_fallthru
      _
    %190 = vsyncpa [#allocation4], 1
    %191 = vsyncpa [#allocation7], 1
    %192 = vsyncpa [#allocation5], 1

</llo_original>
